<compile_context>
chip_gen: v5e
topology: v5e:2x2
jax: 0.10.0
libtpu: 0.0.40
codegen_flags: <defaults>
</compile_context>

<pallas_src>
import functools

import jax
import jax.numpy as jnp
from jax import lax
from jax.experimental import pallas as pl
from jax.experimental.pallas import tpu as pltpu


def _round_up(x, m):
    return (x + m - 1) // m * m


def _mlp_kernel(x_ref, we_ref, be_ref, wh_ref, bh_ref, wd_ref, bd_ref, out_ref,
                *, nlayers):
    """One batch-tile of the whole forward pass (weights resident in VMEM).

    x_ref  : (TB, Din)   f32 inputs, Din = 2*indim (x1 | x2 fused on lanes)
    we_ref : (Din, F)    bf16 block-diag(enc1_w, enc2_w), zero-padded to F
    be_ref : (1,  F)     f32 [enc1_b | enc2_b | 0...]
    wh_ref : (L,  F, F)  bf16 hidden-layer weights (zero-padded)
    bh_ref : (L,  1, F)  f32 hidden-layer biases (zero-padded)
    wd_ref : (F, Fo)     bf16 decoder weight (zero-padded)
    bd_ref : (1, Fo)     f32 decoder bias; pad columns = -inf
    out_ref: (2, TB, Fo) f32; [0] = logits, [1] = softmax probabilities
    """
    # Fused encoders: the lane concat of x1/x2 plus a block-diagonal weight
    # turns the two nn.Linear encoders into a single MXU matmul.
    h = jnp.maximum(
        jnp.dot(x_ref[...].astype(jnp.bfloat16), we_ref[...],
                preferred_element_type=jnp.float32) + be_ref[...], 0.0)

    def layer(i, h):
        return jnp.maximum(
            jnp.dot(h.astype(jnp.bfloat16), wh_ref[i],
                    preferred_element_type=jnp.float32) + bh_ref[i], 0.0)

    if nlayers > 0:
        if nlayers <= 4:
            # Shallow stack: static unroll keeps the LLO scheduler happy.
            for i in range(nlayers):
                h = layer(i, h)
        else:
            # Deep stack: fori_loop bounds live ranges / code size.
            h = lax.fori_loop(0, nlayers, layer, h)

    # Decoder (no ReLU).  Pad columns carry a -inf bias -> exp()==0, so the
    # softmax over the real outdim columns is exact.
    o = jnp.dot(h.astype(jnp.bfloat16), wd_ref[...],
                preferred_element_type=jnp.float32) + bd_ref[...]
    out_ref[0] = o

    # Row-wise numerically stable softmax (f32 epilogue; exact reciprocal so
    # the probability tolerance stays tight — see review note on approx=True).
    m = jnp.max(o, axis=1, keepdims=True)
    e = jnp.exp(o - m)
    out_ref[1] = e * pl.reciprocal(jnp.sum(e, axis=1, keepdims=True), approx=False)


def operator_fixed_length(x1, x2, params, *, nlayers, block_batch=512):
    """x1, x2: (batch, 1, indim) f32.  Returns (o, softmax(o)), each (batch, outdim)."""
    batch, _, indim = x1.shape
    hdim = params["enc1_w"].shape[1] * 2
    outdim = params["dec_w"].shape[1]

    Din = 2 * indim                        # natural input width (full-dim block)
    F = _round_up(hdim, 128)               # lane-dense hidden width
    Fo = _round_up(outdim, 128)            # lane-dense output width
    L = max(nlayers, 1)                    # slab depth (dummy slot if nlayers==0)

    # --- batch tiling: minimize padding, expose >=2 grid steps when possible --
    n_tiles = max(2, -(-batch // block_batch))
    TB = _round_up(-(-batch // n_tiles), 8)
    Bp = _round_up(batch, TB)              # multiple of TB by construction
    grid = Bp // TB

    # --- wrapper-side packing (cheap XLA ops, outside the kernel) -------------
    xc = jnp.concatenate([x1[:, 0, :], x2[:, 0, :]], axis=1)     # (batch, Din)
    xc = jnp.pad(xc, ((0, Bp - batch), (0, 0)))                  # batch pad only

    w_enc = jnp.zeros((Din, F), jnp.float32)
    w_enc = w_enc.at[:indim, :hdim // 2].set(params["enc1_w"])
    w_enc = w_enc.at[indim:, hdim // 2:hdim].set(params["enc2_w"])
    w_enc = w_enc.astype(jnp.bfloat16)

    w_hid = jnp.zeros((L, F, F), jnp.float32)
    b_hid = jnp.zeros((L, 1, F), jnp.float32)
    if nlayers > 0:
        w_hid = w_hid.at[:nlayers, :hdim, :hdim].set(params["layers_w"])
        b_hid = b_hid.at[:nlayers, :, :hdim].set(params["layers_b"])
    w_hid = w_hid.astype(jnp.bfloat16)

    w_dec = (jnp.zeros((F, Fo), jnp.float32)
             .at[:hdim, :outdim].set(params["dec_w"]).astype(jnp.bfloat16))

    b_enc = (jnp.zeros((1, F), jnp.float32)
             .at[:, :hdim].set(jnp.concatenate([params["enc1_b"],
                                                params["enc2_b"]], axis=1)))
    b_dec = (jnp.full((1, Fo), -jnp.inf, jnp.float32)
             .at[:, :outdim].set(params["dec_b"]))

    kernel = functools.partial(_mlp_kernel, nlayers=nlayers)

    # --- VMEM budget + cost estimate -------------------------------------------
    w_bytes = 2 * (Din * F + L * F * F + F * Fo)          # bf16 weights
    b_bytes = 4 * (F + L * F + Fo)                        # f32 biases
    footprint = (2 * (w_bytes + b_bytes)                  # conservative: 2 buffers
                 + 2 * TB * Din * 4                       # input double-buffer
                 + 2 * 2 * TB * Fo * 4                    # packed-output buffers
                 + 6 * TB * F * 4                         # activation working set
                 + (2 << 20))                             # margin
    try:
        cap = int(0.9 * pltpu.get_tpu_info().vmem_capacity_bytes)
    except Exception:                                     # pragma: no cover
        cap = 56 << 20                                    # safe for v7x (64 MiB)
    vmem_limit = int(min(max(footprint, 32 << 20), max(cap, 32 << 20)))

    flops = (2 * Bp * (Din * F + nlayers * F * F + F * Fo)
             + 8 * Bp * ((nlayers + 1) * F + Fo))
    bytes_accessed = Bp * Din * 4 + w_bytes + b_bytes + 2 * Bp * Fo * 4

    def _resident_spec(shape, single_buffer):
        idx = lambda i, _nd=len(shape): (0,) * _nd        # constant -> resident
        if single_buffer:
            return pl.BlockSpec(shape, idx, pipeline_mode=pl.Buffered(1))
        return pl.BlockSpec(shape, idx)

    def _call(single_buffer):
        in_specs = [pl.BlockSpec((TB, Din), lambda i: (i, 0))] + [
            _resident_spec(s, single_buffer)
            for s in [(Din, F), (1, F), (L, F, F), (L, 1, F), (F, Fo), (1, Fo)]]
        return pl.pallas_call(
            kernel,
            out_shape=jax.ShapeDtypeStruct((2, Bp, Fo), jnp.float32),
            grid_spec=pltpu.PrefetchScalarGridSpec(
                num_scalar_prefetch=0,
                grid=(grid,),
                in_specs=in_specs,
                out_specs=pl.BlockSpec((2, TB, Fo), lambda i: (0, i, 0)),
            ),
            compiler_params=pltpu.CompilerParams(
                dimension_semantics=("parallel",),
                vmem_limit_bytes=vmem_limit),
            cost_estimate=pl.CostEstimate(
                flops=flops, transcendentals=Bp * Fo,
                bytes_accessed=bytes_accessed),
        )(xc, w_enc, b_enc, w_hid, b_hid, w_dec, b_dec)

    # Constant-index weights only need one VMEM buffer; fall back to default
    # double-buffering if this jax build rejects pipeline_mode=Buffered(1).
    try:
        packed = _call(True)
    except Exception:
        packed = _call(False)

    # TODO(synk): when nlayers*F*F*2 bytes no longer fits resident in VMEM
    # (e.g. v7x with F >= ~2k and several layers), switch to a (batch, layer)
    # grid that streams one (F, F) weight block per step with h carried in a
    # VMEM scratch accumulator.

    o = packed[0, :batch, :outdim]
    p = packed[1, :batch, :outdim]
    return o, p


def init_params(key, indim, hdim, outdim, nlayers):
    """Deterministic synthetic init (PyTorch-Linear-style uniform bounds)."""
    assert hdim % 2 == 0
    keys = jax.random.split(key, 8)

    def lin(kw, kb, fan_in, fan_out):
        bound = 1.0 / jnp.sqrt(fan_in)
        w = jax.random.uniform(kw, (fan_in, fan_out), jnp.float32, -bound, bound)
        b = jax.random.uniform(kb, (1, fan_out), jnp.float32, -bound, bound)
        return w, b

    enc1_w, enc1_b = lin(keys[0], keys[1], indim, hdim // 2)
    enc2_w, enc2_b = lin(keys[2], keys[3], indim, hdim // 2)

    lw, lb = [], []
    lkeys = jax.random.split(keys[4], 2 * max(nlayers, 1))
    for i in range(nlayers):
        w, b = lin(lkeys[2 * i], lkeys[2 * i + 1], hdim, hdim)
        lw.append(w)
        lb.append(b)
    layers_w = (jnp.stack(lw, axis=0) if nlayers
                else jnp.zeros((0, hdim, hdim), jnp.float32))
    layers_b = (jnp.stack(lb, axis=0) if nlayers
                else jnp.zeros((0, 1, hdim), jnp.float32))

    dec_w, dec_b = lin(keys[5], keys[6], hdim, outdim)

    return dict(enc1_w=enc1_w, enc1_b=enc1_b,
                enc2_w=enc2_w, enc2_b=enc2_b,
                layers_w=layers_w, layers_b=layers_b,
                dec_w=dec_w, dec_b=dec_b)


def _reference(x1, x2, params, nlayers):
    x1 = jnp.squeeze(x1, axis=1)
    x2 = jnp.squeeze(x2, axis=1)
    h1 = jax.nn.relu(x1 @ params["enc1_w"] + params["enc1_b"])
    h2 = jax.nn.relu(x2 @ params["enc2_w"] + params["enc2_b"])
    h = jnp.concatenate([h1, h2], axis=1)
    for i in range(nlayers):
        h = jax.nn.relu(h @ params["layers_w"][i] + params["layers_b"][i])
    o = h @ params["dec_w"] + params["dec_b"]
    return o, jax.nn.softmax(o, axis=1)


if __name__ == "__main__":
    batch, indim, hdim, outdim, nlayers = 8, 16, 32, 8, 2

    key = jax.random.PRNGKey(0)
    k_x1, k_x2, k_p = jax.random.split(key, 3)
    x1 = jax.random.normal(k_x1, (batch, 1, indim), jnp.float32)
    x2 = jax.random.normal(k_x2, (batch, 1, indim), jnp.float32)
    params = init_params(k_p, indim, hdim, outdim, nlayers)

    o, p = operator_fixed_length(x1, x2, params, nlayers=nlayers)
    jax.block_until_ready((o, p))

    o_ref, p_ref = _reference(x1, x2, params, nlayers)
    assert o.shape == (batch, outdim) and p.shape == (batch, outdim)
    # bf16 matmul operands (f32 accumulation) -> ~0.4% relative operand
    # rounding; tolerances relaxed vs. the all-f32 version accordingly.
    assert jnp.allclose(o, o_ref, atol=3e-2, rtol=3e-2), "logits mismatch"
    assert jnp.allclose(p, p_ref, atol=2e-2, rtol=2e-2), "softmax mismatch"
    # Softmax itself is computed exactly in f32 on the kernel's logits, so
    # rows must still sum to 1 tightly.
    assert jnp.allclose(jnp.sum(p, axis=1), 1.0, atol=1e-5), "softmax not normalized"

    print("KERNEL_OK")
</pallas_src>

<mosaic_0001>
module attributes {stable_mosaic.version = 11 : i64} {
  func.func @_mlp_kernel(%arg0: i32, %arg1: memref<8x32xf32, #tpu.memory_space<vmem>>, %arg2: memref<32x128xbf16, #tpu.memory_space<vmem>>, %arg3: memref<1x128xf32, #tpu.memory_space<vmem>>, %arg4: memref<2x128x128xbf16, #tpu.memory_space<vmem>>, %arg5: memref<2x1x128xf32, #tpu.memory_space<vmem>>, %arg6: memref<128x128xbf16, #tpu.memory_space<vmem>>, %arg7: memref<1x128xf32, #tpu.memory_space<vmem>>, %arg8: memref<2x8x128xf32, #tpu.memory_space<vmem>>) attributes {dimension_semantics = [#tpu.dimension_semantics<parallel>], iteration_bounds = array<i64: 1>, scalar_prefetch = 0 : i64, scratch_operands = 0 : i64, tpu.core_type = #tpu.core_type<tc>, window_params = [{transform_indices = @transform_0, window_bounds = array<i64: 8, 32>}, {pipeline_mode = #tpu.pipeline_mode<synchronous>, transform_indices = @transform_1, window_bounds = array<i64: 32, 128>}, {pipeline_mode = #tpu.pipeline_mode<synchronous>, transform_indices = @transform_2, window_bounds = array<i64: 1, 128>}, {pipeline_mode = #tpu.pipeline_mode<synchronous>, transform_indices = @transform_3, window_bounds = array<i64: 2, 128, 128>}, {pipeline_mode = #tpu.pipeline_mode<synchronous>, transform_indices = @transform_4, window_bounds = array<i64: 2, 1, 128>}, {pipeline_mode = #tpu.pipeline_mode<synchronous>, transform_indices = @transform_5, window_bounds = array<i64: 128, 128>}, {pipeline_mode = #tpu.pipeline_mode<synchronous>, transform_indices = @transform_6, window_bounds = array<i64: 1, 128>}, {transform_indices = @transform_7, window_bounds = array<i64: 2, 8, 128>}]} {
    %c0 = arith.constant 0 : index
    %c0_0 = arith.constant 0 : index
    %0 = vector.load %arg1[%c0, %c0_0] : memref<8x32xf32, #tpu.memory_space<vmem>>, vector<8x32xf32>
    %1 = arith.truncf %0 : vector<8x32xf32> to vector<8x32xbf16>
    %c0_1 = arith.constant 0 : index
    %c0_2 = arith.constant 0 : index
    %2 = vector.load %arg2[%c0_1, %c0_2] : memref<32x128xbf16, #tpu.memory_space<vmem>>, vector<32x128xbf16>
    %cst = arith.constant dense<0.000000e+00> : vector<8x128xf32>
    %3 = tpu.matmul %1, %2, %cst {dimension_numbers = #tpu.dot_dimension_numbers<[1], [0], [0], [1], [0, 0, 1, 1], [], []>} : vector<8x32xbf16>, vector<32x128xbf16>, vector<8x128xf32> -> vector<8x128xf32>
    %c0_3 = arith.constant 0 : index
    %c0_4 = arith.constant 0 : index
    %4 = vector.load %arg3[%c0_3, %c0_4] : memref<1x128xf32, #tpu.memory_space<vmem>>, vector<1x128xf32>
    %5 = vector.broadcast %4 : vector<1x128xf32> to vector<8x128xf32>
    %6 = arith.addf %3, %5 : vector<8x128xf32>
    %cst_5 = arith.constant 0.000000e+00 : f32
    %7 = vector.broadcast %cst_5 : f32 to vector<8x128xf32>
    %8 = arith.maximumf %6, %7 : vector<8x128xf32>
    %9 = arith.truncf %8 : vector<8x128xf32> to vector<8x128xbf16>
    %c0_6 = arith.constant 0 : index
    %c0_7 = arith.constant 0 : index
    %c0_8 = arith.constant 0 : index
    %10 = vector.load %arg4[%c0_6, %c0_7, %c0_8] : memref<2x128x128xbf16, #tpu.memory_space<vmem>>, vector<1x128x128xbf16>
    %11 = vector.shape_cast %10 : vector<1x128x128xbf16> to vector<128x128xbf16>
    %cst_9 = arith.constant dense<0.000000e+00> : vector<8x128xf32>
    %12 = tpu.matmul %9, %11, %cst_9 {dimension_numbers = #tpu.dot_dimension_numbers<[1], [0], [0], [1], [0, 0, 1, 1], [], []>} : vector<8x128xbf16>, vector<128x128xbf16>, vector<8x128xf32> -> vector<8x128xf32>
    %c0_10 = arith.constant 0 : index
    %c0_11 = arith.constant 0 : index
    %c0_12 = arith.constant 0 : index
    %13 = vector.load %arg5[%c0_10, %c0_11, %c0_12] : memref<2x1x128xf32, #tpu.memory_space<vmem>>, vector<1x1x128xf32>
    %14 = vector.shape_cast %13 : vector<1x1x128xf32> to vector<1x128xf32>
    %15 = vector.broadcast %14 : vector<1x128xf32> to vector<8x128xf32>
    %16 = arith.addf %12, %15 : vector<8x128xf32>
    %cst_13 = arith.constant 0.000000e+00 : f32
    %17 = vector.broadcast %cst_13 : f32 to vector<8x128xf32>
    %18 = arith.maximumf %16, %17 : vector<8x128xf32>
    %19 = arith.truncf %18 : vector<8x128xf32> to vector<8x128xbf16>
    %c1 = arith.constant 1 : index
    %c0_14 = arith.constant 0 : index
    %c0_15 = arith.constant 0 : index
    %20 = vector.load %arg4[%c1, %c0_14, %c0_15] : memref<2x128x128xbf16, #tpu.memory_space<vmem>>, vector<1x128x128xbf16>
    %21 = vector.shape_cast %20 : vector<1x128x128xbf16> to vector<128x128xbf16>
    %cst_16 = arith.constant dense<0.000000e+00> : vector<8x128xf32>
    %22 = tpu.matmul %19, %21, %cst_16 {dimension_numbers = #tpu.dot_dimension_numbers<[1], [0], [0], [1], [0, 0, 1, 1], [], []>} : vector<8x128xbf16>, vector<128x128xbf16>, vector<8x128xf32> -> vector<8x128xf32>
    %c1_17 = arith.constant 1 : index
    %c0_18 = arith.constant 0 : index
    %c0_19 = arith.constant 0 : index
    %23 = vector.load %arg5[%c1_17, %c0_18, %c0_19] : memref<2x1x128xf32, #tpu.memory_space<vmem>>, vector<1x1x128xf32>
    %24 = vector.shape_cast %23 : vector<1x1x128xf32> to vector<1x128xf32>
    %25 = vector.broadcast %24 : vector<1x128xf32> to vector<8x128xf32>
    %26 = arith.addf %22, %25 : vector<8x128xf32>
    %cst_20 = arith.constant 0.000000e+00 : f32
    %27 = vector.broadcast %cst_20 : f32 to vector<8x128xf32>
    %28 = arith.maximumf %26, %27 : vector<8x128xf32>
    %29 = arith.truncf %28 : vector<8x128xf32> to vector<8x128xbf16>
    %c0_21 = arith.constant 0 : index
    %c0_22 = arith.constant 0 : index
    %30 = vector.load %arg6[%c0_21, %c0_22] : memref<128x128xbf16, #tpu.memory_space<vmem>>, vector<128x128xbf16>
    %cst_23 = arith.constant dense<0.000000e+00> : vector<8x128xf32>
    %31 = tpu.matmul %29, %30, %cst_23 {dimension_numbers = #tpu.dot_dimension_numbers<[1], [0], [0], [1], [0, 0, 1, 1], [], []>} : vector<8x128xbf16>, vector<128x128xbf16>, vector<8x128xf32> -> vector<8x128xf32>
    %c0_24 = arith.constant 0 : index
    %c0_25 = arith.constant 0 : index
    %32 = vector.load %arg7[%c0_24, %c0_25] : memref<1x128xf32, #tpu.memory_space<vmem>>, vector<1x128xf32>
    %33 = vector.broadcast %32 : vector<1x128xf32> to vector<8x128xf32>
    %34 = arith.addf %31, %33 : vector<8x128xf32>
    %c0_26 = arith.constant 0 : index
    %c0_27 = arith.constant 0 : index
    %c0_28 = arith.constant 0 : index
    %35 = vector.load %arg8[%c0_26, %c0_27, %c0_28] : memref<2x8x128xf32, #tpu.memory_space<vmem>>, vector<1x8x128xf32>
    %36 = vector.shape_cast %35 : vector<1x8x128xf32> to vector<8x128xf32>
    %37 = vector.shape_cast %34 : vector<8x128xf32> to vector<1x8x128xf32>
    tpu.vector_store %arg8[%c0_26, %c0_27, %c0_28], %37 {strides = array<i32>} : memref<2x8x128xf32, #tpu.memory_space<vmem>>, vector<1x8x128xf32>,
    %cst_29 = arith.constant dense<0xFF800000> : vector<8xf32>
    %38 = vector.multi_reduction <maximumf>, %34, %cst_29 [1] : vector<8x128xf32> to vector<8xf32>
    %39 = vector.shape_cast %38 : vector<8xf32> to vector<8x1xf32>
    %40 = vector.broadcast %39 : vector<8x1xf32> to vector<8x128xf32>
    %41 = arith.subf %34, %40 : vector<8x128xf32>
    %42 = math.exp %41 : vector<8x128xf32>
    %cst_30 = arith.constant dense<0.000000e+00> : vector<8xf32>
    %43 = vector.multi_reduction <add>, %42, %cst_30 [1] : vector<8x128xf32> to vector<8xf32>
    %44 = vector.shape_cast %43 : vector<8xf32> to vector<8x1xf32>
    %45 = tpu.reciprocal %44 : vector<8x1xf32> -> vector<8x1xf32>
    %46 = vector.broadcast %45 : vector<8x1xf32> to vector<8x128xf32>
    %47 = arith.mulf %42, %46 : vector<8x128xf32>
    %c1_31 = arith.constant 1 : index
    %c0_32 = arith.constant 0 : index
    %c0_33 = arith.constant 0 : index
    %48 = vector.load %arg8[%c1_31, %c0_32, %c0_33] : memref<2x8x128xf32, #tpu.memory_space<vmem>>, vector<1x8x128xf32>
    %49 = vector.shape_cast %48 : vector<1x8x128xf32> to vector<8x128xf32>
    %50 = vector.shape_cast %47 : vector<8x128xf32> to vector<1x8x128xf32>
    tpu.vector_store %arg8[%c1_31, %c0_32, %c0_33], %50 {strides = array<i32>} : memref<2x8x128xf32, #tpu.memory_space<vmem>>, vector<1x8x128xf32>,
    return
  }
  func.func @transform_0(%arg0: i32) -> (i32, i32) {
    %c0_i32 = arith.constant 0 : i32
    %c0_i32_0 = arith.constant 0 : i32
    return %arg0, %c0_i32 : i32, i32
  }
  func.func @transform_1(%arg0: i32) -> (i32, i32) {
    %c0_i32 = arith.constant 0 : i32
    %c0_i32_0 = arith.constant 0 : i32
    %c0_i32_1 = arith.constant 0 : i32
    return %c0_i32, %c0_i32_0 : i32, i32
  }
  func.func @transform_2(%arg0: i32) -> (i32, i32) {
    %c0_i32 = arith.constant 0 : i32
    %c0_i32_0 = arith.constant 0 : i32
    %c0_i32_1 = arith.constant 0 : i32
    return %c0_i32, %c0_i32_0 : i32, i32
  }
  func.func @transform_3(%arg0: i32) -> (i32, i32, i32) {
    %c0_i32 = arith.constant 0 : i32
    %c0_i32_0 = arith.constant 0 : i32
    %c0_i32_1 = arith.constant 0 : i32
    %c0_i32_2 = arith.constant 0 : i32
    return %c0_i32, %c0_i32_0, %c0_i32_1 : i32, i32, i32
  }
  func.func @transform_4(%arg0: i32) -> (i32, i32, i32) {
    %c0_i32 = arith.constant 0 : i32
    %c0_i32_0 = arith.constant 0 : i32
    %c0_i32_1 = arith.constant 0 : i32
    %c0_i32_2 = arith.constant 0 : i32
    return %c0_i32, %c0_i32_0, %c0_i32_1 : i32, i32, i32
  }
  func.func @transform_5(%arg0: i32) -> (i32, i32) {
    %c0_i32 = arith.constant 0 : i32
    %c0_i32_0 = arith.constant 0 : i32
    %c0_i32_1 = arith.constant 0 : i32
    return %c0_i32, %c0_i32_0 : i32, i32
  }
  func.func @transform_6(%arg0: i32) -> (i32, i32) {
    %c0_i32 = arith.constant 0 : i32
    %c0_i32_0 = arith.constant 0 : i32
    %c0_i32_1 = arith.constant 0 : i32
    return %c0_i32, %c0_i32_0 : i32, i32
  }
  func.func @transform_7(%arg0: i32) -> (i32, i32, i32) {
    %c0_i32 = arith.constant 0 : i32
    %c0_i32_0 = arith.constant 0 : i32
    %c0_i32_1 = arith.constant 0 : i32
    return %c0_i32, %arg0, %c0_i32_0 : i32, i32, i32
  }
}

module attributes {stable_mosaic.version = 11 : i64} {
  func.func @_mlp_kernel(%arg0: i32, %arg1: memref<8x32xf32, #tpu.memory_space<vmem>>, %arg2: memref<32x128xbf16, #tpu.memory_space<vmem>>, %arg3: memref<1x128xf32, #tpu.memory_space<vmem>>, %arg4: memref<2x128x128xbf16, #tpu.memory_space<vmem>>, %arg5: memref<2x1x128xf32, #tpu.memory_space<vmem>>, %arg6: memref<128x128xbf16, #tpu.memory_space<vmem>>, %arg7: memref<1x128xf32, #tpu.memory_space<vmem>>, %arg8: memref<2x8x128xf32, #tpu.memory_space<vmem>>) attributes {dimension_semantics = [#tpu.dimension_semantics<parallel>], iteration_bounds = array<i64: 1>, scalar_prefetch = 0 : i64, scratch_operands = 0 : i64, tpu.core_type = #tpu.core_type<tc>, window_params = [{transform_indices = @transform_0, window_bounds = array<i64: 8, 32>}, {pipeline_mode = #tpu.pipeline_mode<synchronous>, transform_indices = @transform_1, window_bounds = array<i64: 32, 128>}, {pipeline_mode = #tpu.pipeline_mode<synchronous>, transform_indices = @transform_2, window_bounds = array<i64: 1, 128>}, {pipeline_mode = #tpu.pipeline_mode<synchronous>, transform_indices = @transform_3, window_bounds = array<i64: 2, 128, 128>}, {pipeline_mode = #tpu.pipeline_mode<synchronous>, transform_indices = @transform_4, window_bounds = array<i64: 2, 1, 128>}, {pipeline_mode = #tpu.pipeline_mode<synchronous>, transform_indices = @transform_5, window_bounds = array<i64: 128, 128>}, {pipeline_mode = #tpu.pipeline_mode<synchronous>, transform_indices = @transform_6, window_bounds = array<i64: 1, 128>}, {transform_indices = @transform_7, window_bounds = array<i64: 2, 8, 128>}]} {
    %c0 = arith.constant 0 : index
    %c0_0 = arith.constant 0 : index
    %0 = vector.load %arg1[%c0, %c0_0] : memref<8x32xf32, #tpu.memory_space<vmem>>, vector<8x32xf32>
    %1 = arith.truncf %0 : vector<8x32xf32> to vector<8x32xbf16>
    %c0_1 = arith.constant 0 : index
    %c0_2 = arith.constant 0 : index
    %2 = vector.load %arg2[%c0_1, %c0_2] : memref<32x128xbf16, #tpu.memory_space<vmem>>, vector<32x128xbf16>
    %cst = arith.constant dense<0.000000e+00> : vector<8x128xf32>
    %3 = tpu.matmul %1, %2, %cst {dimension_numbers = #tpu.dot_dimension_numbers<[1], [0], [0], [1], [0, 0, 1, 1], [], []>} : vector<8x32xbf16>, vector<32x128xbf16>, vector<8x128xf32> -> vector<8x128xf32>
    %c0_3 = arith.constant 0 : index
    %c0_4 = arith.constant 0 : index
    %4 = vector.load %arg3[%c0_3, %c0_4] : memref<1x128xf32, #tpu.memory_space<vmem>>, vector<1x128xf32>
    %5 = vector.broadcast %4 : vector<1x128xf32> to vector<8x128xf32>
    %6 = arith.addf %3, %5 : vector<8x128xf32>
    %cst_5 = arith.constant 0.000000e+00 : f32
    %7 = vector.broadcast %cst_5 : f32 to vector<8x128xf32>
    %8 = arith.maximumf %6, %7 : vector<8x128xf32>
    %9 = arith.truncf %8 : vector<8x128xf32> to vector<8x128xbf16>
    %c0_6 = arith.constant 0 : index
    %c0_7 = arith.constant 0 : index
    %c0_8 = arith.constant 0 : index
    %10 = vector.load %arg4[%c0_6, %c0_7, %c0_8] : memref<2x128x128xbf16, #tpu.memory_space<vmem>>, vector<1x128x128xbf16>
    %11 = vector.shape_cast %10 : vector<1x128x128xbf16> to vector<128x128xbf16>
    %cst_9 = arith.constant dense<0.000000e+00> : vector<8x128xf32>
    %12 = tpu.matmul %9, %11, %cst_9 {dimension_numbers = #tpu.dot_dimension_numbers<[1], [0], [0], [1], [0, 0, 1, 1], [], []>} : vector<8x128xbf16>, vector<128x128xbf16>, vector<8x128xf32> -> vector<8x128xf32>
    %c0_10 = arith.constant 0 : index
    %c0_11 = arith.constant 0 : index
    %c0_12 = arith.constant 0 : index
    %13 = vector.load %arg5[%c0_10, %c0_11, %c0_12] : memref<2x1x128xf32, #tpu.memory_space<vmem>>, vector<1x1x128xf32>
    %14 = vector.shape_cast %13 : vector<1x1x128xf32> to vector<1x128xf32>
    %15 = vector.broadcast %14 : vector<1x128xf32> to vector<8x128xf32>
    %16 = arith.addf %12, %15 : vector<8x128xf32>
    %cst_13 = arith.constant 0.000000e+00 : f32
    %17 = vector.broadcast %cst_13 : f32 to vector<8x128xf32>
    %18 = arith.maximumf %16, %17 : vector<8x128xf32>
    %19 = arith.truncf %18 : vector<8x128xf32> to vector<8x128xbf16>
    %c1 = arith.constant 1 : index
    %c0_14 = arith.constant 0 : index
    %c0_15 = arith.constant 0 : index
    %20 = vector.load %arg4[%c1, %c0_14, %c0_15] : memref<2x128x128xbf16, #tpu.memory_space<vmem>>, vector<1x128x128xbf16>
    %21 = vector.shape_cast %20 : vector<1x128x128xbf16> to vector<128x128xbf16>
    %cst_16 = arith.constant dense<0.000000e+00> : vector<8x128xf32>
    %22 = tpu.matmul %19, %21, %cst_16 {dimension_numbers = #tpu.dot_dimension_numbers<[1], [0], [0], [1], [0, 0, 1, 1], [], []>} : vector<8x128xbf16>, vector<128x128xbf16>, vector<8x128xf32> -> vector<8x128xf32>
    %c1_17 = arith.constant 1 : index
    %c0_18 = arith.constant 0 : index
    %c0_19 = arith.constant 0 : index
    %23 = vector.load %arg5[%c1_17, %c0_18, %c0_19] : memref<2x1x128xf32, #tpu.memory_space<vmem>>, vector<1x1x128xf32>
    %24 = vector.shape_cast %23 : vector<1x1x128xf32> to vector<1x128xf32>
    %25 = vector.broadcast %24 : vector<1x128xf32> to vector<8x128xf32>
    %26 = arith.addf %22, %25 : vector<8x128xf32>
    %cst_20 = arith.constant 0.000000e+00 : f32
    %27 = vector.broadcast %cst_20 : f32 to vector<8x128xf32>
    %28 = arith.maximumf %26, %27 : vector<8x128xf32>
    %29 = arith.truncf %28 : vector<8x128xf32> to vector<8x128xbf16>
    %c0_21 = arith.constant 0 : index
    %c0_22 = arith.constant 0 : index
    %30 = vector.load %arg6[%c0_21, %c0_22] : memref<128x128xbf16, #tpu.memory_space<vmem>>, vector<128x128xbf16>
    %cst_23 = arith.constant dense<0.000000e+00> : vector<8x128xf32>
    %31 = tpu.matmul %29, %30, %cst_23 {dimension_numbers = #tpu.dot_dimension_numbers<[1], [0], [0], [1], [0, 0, 1, 1], [], []>} : vector<8x128xbf16>, vector<128x128xbf16>, vector<8x128xf32> -> vector<8x128xf32>
    %c0_24 = arith.constant 0 : index
    %c0_25 = arith.constant 0 : index
    %32 = vector.load %arg7[%c0_24, %c0_25] : memref<1x128xf32, #tpu.memory_space<vmem>>, vector<1x128xf32>
    %33 = vector.broadcast %32 : vector<1x128xf32> to vector<8x128xf32>
    %34 = arith.addf %31, %33 : vector<8x128xf32>
    %c0_26 = arith.constant 0 : index
    %c0_27 = arith.constant 0 : index
    %c0_28 = arith.constant 0 : index
    %35 = vector.load %arg8[%c0_26, %c0_27, %c0_28] : memref<2x8x128xf32, #tpu.memory_space<vmem>>, vector<1x8x128xf32>
    %36 = vector.shape_cast %35 : vector<1x8x128xf32> to vector<8x128xf32>
    %37 = vector.shape_cast %34 : vector<8x128xf32> to vector<1x8x128xf32>
    tpu.vector_store %arg8[%c0_26, %c0_27, %c0_28], %37 {strides = array<i32>} : memref<2x8x128xf32, #tpu.memory_space<vmem>>, vector<1x8x128xf32>,
    %cst_29 = arith.constant dense<0xFF800000> : vector<8xf32>
    %38 = vector.multi_reduction <maximumf>, %34, %cst_29 [1] : vector<8x128xf32> to vector<8xf32>
    %39 = vector.shape_cast %38 : vector<8xf32> to vector<8x1xf32>
    %40 = vector.broadcast %39 : vector<8x1xf32> to vector<8x128xf32>
    %41 = arith.subf %34, %40 : vector<8x128xf32>
    %42 = math.exp %41 : vector<8x128xf32>
    %cst_30 = arith.constant dense<0.000000e+00> : vector<8xf32>
    %43 = vector.multi_reduction <add>, %42, %cst_30 [1] : vector<8x128xf32> to vector<8xf32>
    %44 = vector.shape_cast %43 : vector<8xf32> to vector<8x1xf32>
    %45 = tpu.reciprocal %44 : vector<8x1xf32> -> vector<8x1xf32>
    %46 = vector.broadcast %45 : vector<8x1xf32> to vector<8x128xf32>
    %47 = arith.mulf %42, %46 : vector<8x128xf32>
    %c1_31 = arith.constant 1 : index
    %c0_32 = arith.constant 0 : index
    %c0_33 = arith.constant 0 : index
    %48 = vector.load %arg8[%c1_31, %c0_32, %c0_33] : memref<2x8x128xf32, #tpu.memory_space<vmem>>, vector<1x8x128xf32>
    %49 = vector.shape_cast %48 : vector<1x8x128xf32> to vector<8x128xf32>
    %50 = vector.shape_cast %47 : vector<8x128xf32> to vector<1x8x128xf32>
    tpu.vector_store %arg8[%c1_31, %c0_32, %c0_33], %50 {strides = array<i32>} : memref<2x8x128xf32, #tpu.memory_space<vmem>>, vector<1x8x128xf32>,
    return
  }
  func.func @transform_0(%arg0: i32) -> (i32, i32) {
    %c0_i32 = arith.constant 0 : i32
    %c0_i32_0 = arith.constant 0 : i32
    return %arg0, %c0_i32 : i32, i32
  }
  func.func @transform_1(%arg0: i32) -> (i32, i32) {
    %c0_i32 = arith.constant 0 : i32
    %c0_i32_0 = arith.constant 0 : i32
    %c0_i32_1 = arith.constant 0 : i32
    return %c0_i32, %c0_i32_0 : i32, i32
  }
  func.func @transform_2(%arg0: i32) -> (i32, i32) {
    %c0_i32 = arith.constant 0 : i32
    %c0_i32_0 = arith.constant 0 : i32
    %c0_i32_1 = arith.constant 0 : i32
    return %c0_i32, %c0_i32_0 : i32, i32
  }
  func.func @transform_3(%arg0: i32) -> (i32, i32, i32) {
    %c0_i32 = arith.constant 0 : i32
    %c0_i32_0 = arith.constant 0 : i32
    %c0_i32_1 = arith.constant 0 : i32
    %c0_i32_2 = arith.constant 0 : i32
    return %c0_i32, %c0_i32_0, %c0_i32_1 : i32, i32, i32
  }
  func.func @transform_4(%arg0: i32) -> (i32, i32, i32) {
    %c0_i32 = arith.constant 0 : i32
    %c0_i32_0 = arith.constant 0 : i32
    %c0_i32_1 = arith.constant 0 : i32
    %c0_i32_2 = arith.constant 0 : i32
    return %c0_i32, %c0_i32_0, %c0_i32_1 : i32, i32, i32
  }
  func.func @transform_5(%arg0: i32) -> (i32, i32) {
    %c0_i32 = arith.constant 0 : i32
    %c0_i32_0 = arith.constant 0 : i32
    %c0_i32_1 = arith.constant 0 : i32
    return %c0_i32, %c0_i32_0 : i32, i32
  }
  func.func @transform_6(%arg0: i32) -> (i32, i32) {
    %c0_i32 = arith.constant 0 : i32
    %c0_i32_0 = arith.constant 0 : i32
    %c0_i32_1 = arith.constant 0 : i32
    return %c0_i32, %c0_i32_0 : i32, i32
  }
  func.func @transform_7(%arg0: i32) -> (i32, i32, i32) {
    %c0_i32 = arith.constant 0 : i32
    %c0_i32_0 = arith.constant 0 : i32
    %c0_i32_1 = arith.constant 0 : i32
    return %c0_i32, %arg0, %c0_i32_0 : i32, i32, i32
  }
}

</mosaic_0001>

<llo_original>
// kernel: tpu_custom_call.1
$region0: #{tpu_custom_call.1}
  #allocation0 [shape = 'u32[]', space=smem, size = 0x4, offset = 0x4, fixed_abs, tag = 'smem constant byte address 0x4 - core index']
  #allocation1 [shape = 'u32[72,128]{1,0:T(1,128)}', space=vmem, size = 0x9000, scoped, tag = 'internal scratch']
  %s0 = inlined_call_operand.hbm [shape: f32[8,32], index: 0, kind: input, shape index: {}]
  %s1 = inlined_call_operand.hbm [shape: bf16[32,128], index: 1, kind: input, shape index: {}]
  %s2 = inlined_call_operand.vmem [shape: f32[1,128], index: 2, kind: input, shape index: {}]
  %s3 = inlined_call_operand.hbm [shape: bf16[2,128,128], index: 3, kind: input, shape index: {}]
  %s4 = inlined_call_operand.vmem [shape: f32[2,1,128], index: 4, kind: input, shape index: {}]
  %s5 = inlined_call_operand.hbm [shape: bf16[128,128], index: 5, kind: input, shape index: {}]
  %s6 = inlined_call_operand.vmem [shape: f32[1,128], index: 6, kind: input, shape index: {}]
  %s7 = inlined_call_operand.hbm [shape: f32[2,8,128], index: 7, kind: output, shape index: {}]
  %s8 = sld [smem:[#allocation0]]
  $region54: #{tpu_custom_call.1} parent=0
    _
  %s10 = ssub.s32 1, %s8
  %s11 = scalar_select 0, %s10, %s8
  $region1: #{tpu_custom_call.1} parent=0
    #allocation2 [shape = 'u8[4096]{0}', space=vmem, size = 0x1000, scoped, tag = 'input window, operand 0, single buffered']
    #allocation3 [shape = 's32[1]{0}', space=sflag, size = 0x4, scoped, tag = 'scoped memory for tpu_custom_call.1']
    #allocation4 [shape = 's32[1]{0}', space=sflag, size = 0x4, scoped, tag = 'scoped memory for tpu_custom_call.1']
    #allocation5 [shape = 'u8[8192]{0}', space=vmem, size = 0x2000, scoped, tag = 'input window, operand 1, single buffered']
    #allocation6 [shape = 's32[1]{0}', space=sflag, size = 0x4, scoped, tag = 'scoped memory for tpu_custom_call.1']
    #allocation7 [shape = 'u8[65536]{0}', space=vmem, size = 0x10000, scoped, tag = 'input window, operand 3, single buffered']
    #allocation8 [shape = 'u8[32768]{0}', space=vmem, size = 0x8000, scoped, tag = 'input window, operand 5, single buffered']
    #allocation9 [shape = 's32[1]{0}', space=sflag, size = 0x4, scoped, tag = 'scoped memory for tpu_custom_call.1']
    #allocation10 [shape = 'u8[8192]{0}', space=vmem, size = 0x2000, scoped, tag = 'output window, operand 0, single buffered']
    %12 = vsyncpa [#allocation3], 0
    %13 = vsyncpa [#allocation6], 0
    %14 = vsyncpa [#allocation9], 0
    %15 = vsyncpa [#allocation4], 0
    // Predicated region
    $region2: #{tpu_custom_call.1} parent=1 // pred_check
      _
    $region3: #{tpu_custom_call.1} parent=1 // pred_check_branch
      %17 = sbr.rel (0) target = $region5
    $region4: #{tpu_custom_call.1} parent=1 // pred_region
      %19 = vsyncadd [#allocation3], 0
      %s21 = sshll.u32 %s0, 4
      %s22 = int_to_ptr.hbm [resolvable:$true] %s21
      %s23 = sshll.u32 [#allocation2], 4
      %s24 = int_to_ptr.vmem [resolvable:$true] %s23
      %26 = dma.hbm_to_vmem [thread:$0]  %s22, 128, %s24, [#allocation3]
    $region5: #{tpu_custom_call.1} parent=1 // pred_fallthru
      _
    // Predicated region
    $region6: #{tpu_custom_call.1} parent=1 // pred_check
      _
    $region7: #{tpu_custom_call.1} parent=1 // pred_check_branch
      %28 = sbr.rel (0) target = $region9
    $region8: #{tpu_custom_call.1} parent=1 // pred_region
      %30 = vsyncadd [#allocation6], 0
      %s31 = sshll.u32 %s1, 4
      %s32 = int_to_ptr.hbm [resolvable:$true] %s31
      %s33 = sshll.u32 [#allocation5], 4
      %s34 = int_to_ptr.vmem [resolvable:$true] %s33
      %39 = dma.hbm_to_vmem [thread:$0]  %s32, 256, %s34, [#allocation6], 64, 64, 4
    $region9: #{tpu_custom_call.1} parent=1 // pred_fallthru
      _
    // Predicated region
    $region10: #{tpu_custom_call.1} parent=1 // pred_check
      _
    $region11: #{tpu_custom_call.1} parent=1 // pred_check_branch
      %41 = sbr.rel (0) target = $region13
    $region12: #{tpu_custom_call.1} parent=1 // pred_region
      _
    $region13: #{tpu_custom_call.1} parent=1 // pred_fallthru
      _
    // Predicated region
    $region14: #{tpu_custom_call.1} parent=1 // pred_check
      _
    $region15: #{tpu_custom_call.1} parent=1 // pred_check_branch
      %43 = sbr.rel (0) target = $region17
    $region16: #{tpu_custom_call.1} parent=1 // pred_region
      %45 = vsyncadd [#allocation6], 0
      %s46 = sshll.u32 %s3, 4
      %s47 = int_to_ptr.hbm [resolvable:$true] %s46
      %s48 = sshll.u32 [#allocation7], 4
      %s49 = int_to_ptr.vmem [resolvable:$true] %s48
      %54 = dma.hbm_to_vmem [thread:$0]  %s47, 2048, %s49, [#allocation6], 64, 64, 4
    $region17: #{tpu_custom_call.1} parent=1 // pred_fallthru
      _
    // Predicated region
    $region18: #{tpu_custom_call.1} parent=1 // pred_check
      _
    $region19: #{tpu_custom_call.1} parent=1 // pred_check_branch
      %56 = sbr.rel (0) target = $region21
    $region20: #{tpu_custom_call.1} parent=1 // pred_region
      _
    $region21: #{tpu_custom_call.1} parent=1 // pred_fallthru
      _
    // Predicated region
    $region22: #{tpu_custom_call.1} parent=1 // pred_check
      _
    $region23: #{tpu_custom_call.1} parent=1 // pred_check_branch
      %58 = sbr.rel (0) target = $region25
    $region24: #{tpu_custom_call.1} parent=1 // pred_region
      %60 = vsyncadd [#allocation9], 0
      %s61 = sshll.u32 %s5, 4
      %s62 = int_to_ptr.hbm [resolvable:$true] %s61
      %s63 = sshll.u32 [#allocation8], 4
      %s64 = int_to_ptr.vmem [resolvable:$true] %s63
      %69 = dma.hbm_to_vmem [thread:$0]  %s62, 1024, %s64, [#allocation9], 64, 64, 4
    $region25: #{tpu_custom_call.1} parent=1 // pred_fallthru
      _
    // Predicated region
    $region26: #{tpu_custom_call.1} parent=1 // pred_check
      _
    $region27: #{tpu_custom_call.1} parent=1 // pred_check_branch
      %71 = sbr.rel (0) target = $region29
    $region28: #{tpu_custom_call.1} parent=1 // pred_region
      _
    $region29: #{tpu_custom_call.1} parent=1 // pred_fallthru
      _
    // Predicated region
    $region30: #{tpu_custom_call.1} parent=1 // pred_check
      _
    $region31: #{tpu_custom_call.1} parent=1 // pred_check_branch
      %73 = sbr.rel (0) target = $region33
    $region32: #{tpu_custom_call.1} parent=1 // pred_region
      %75 = dma.done [#allocation3], 128
    $region33: #{tpu_custom_call.1} parent=1 // pred_fallthru
      _
    // Predicated region
    $region34: #{tpu_custom_call.1} parent=1 // pred_check
      _
    $region35: #{tpu_custom_call.1} parent=1 // pred_check_branch
      %77 = sbr.rel (0) target = $region37
    $region36: #{tpu_custom_call.1} parent=1 // pred_region
      %79 = dma.done [#allocation6], 256
    $region37: #{tpu_custom_call.1} parent=1 // pred_fallthru
      _
    // Predicated region
    $region38: #{tpu_custom_call.1} parent=1 // pred_check
      _
    $region39: #{tpu_custom_call.1} parent=1 // pred_check_branch
      %81 = sbr.rel (0) target = $region41
    $region40: #{tpu_custom_call.1} parent=1 // pred_region
      %83 = dma.done [#allocation6], 2048
    $region41: #{tpu_custom_call.1} parent=1 // pred_fallthru
      _
    // Predicated region
    $region42: #{tpu_custom_call.1} parent=1 // pred_check
      _
    $region43: #{tpu_custom_call.1} parent=1 // pred_check_branch
      %85 = sbr.rel (0) target = $region45
    $region44: #{tpu_custom_call.1} parent=1 // pred_region
      %87 = dma.done [#allocation9], 1024
    $region45: #{tpu_custom_call.1} parent=1 // pred_fallthru
      _
    %v89 = vld [vmem:[#allocation2] sm:$0xff]
    %v90 = vpack.c.bf16 %v89, %v89
    %v91 = vld [vmem:[#allocation5] sm:$0xf]
    %v92 = vld [vmem:[#allocation5 + $0x4] sm:$0xf]
    %v93 = vld [vmem:[#allocation5 + $0x8] sm:$0xf]
    %v94 = vld [vmem:[#allocation5 + $0xc] sm:$0xf]
    %v95 = vld [vmem:[%s2] sm:$0x1]
    %v97 = vperm.slane %v95, 0
    %v103 = vunpack.c.l.b16 %v91
    %v104 = vunpack.c.l.b16 %v92
    %v105 = vunpack.c.l.b16 %v93
    %v106 = vunpack.c.l.b16 %v94
    %v107 = vpack.c.b16 %v104, %v103
    %v108 = vpack.c.b16 %v106, %v105
    %vm111 = vcmask 261120
    %v113 = vsel %vm111, %v90, 0
    %115 = vmatpush.bf16.msra.mxu0 0
    %116 = vmatpush.bf16.msra.mxu0 0
    %117 = vmatpush.bf16.msra.mxu0 0
    %118 = vmatpush.bf16.msra.mxu0 0
    %119 = vmatpush.bf16.msra.mxu0 0
    %120 = vmatpush.bf16.msra.mxu0 0
    %121 = vmatpush.bf16.msra.mxu0 %v108
    %122 = vmatpush.bf16.msra.mxu0 %v107
    %123 = vmatmul.bf16.gmra.mxu0 %v113
    %v124 = vpop.f32.mrf.mxu0
    %v125 = vadd.f32 %v97, %v124
    %v126 = vpop.f32.mrf.mxu0
    %127 = vdwg.mxu0
    %v128 = vmax.f32 %v125, 0.0
    %v129 = vpack.c.bf16 %v128, %v128
    %v130 = vld [vmem:[#allocation7] sm:$0xf]
    %v131 = vld [vmem:[#allocation7 + $0x4] sm:$0xf]
    %v132 = vld [vmem:[#allocation7 + $0x8] sm:$0xf]
    %v133 = vld [vmem:[#allocation7 + $0xc] sm:$0xf]
    %v134 = vld [vmem:[#allocation7 + $0x10] sm:$0xf]
    %v135 = vld [vmem:[#allocation7 + $0x14] sm:$0xf]
    %v136 = vld [vmem:[#allocation7 + $0x18] sm:$0xf]
    %v137 = vld [vmem:[#allocation7 + $0x1c] sm:$0xf]
    %v138 = vld [vmem:[#allocation7 + $0x20] sm:$0xf]
    %v139 = vld [vmem:[#allocation7 + $0x24] sm:$0xf]
    %v140 = vld [vmem:[#allocation7 + $0x28] sm:$0xf]
    %v141 = vld [vmem:[#allocation7 + $0x2c] sm:$0xf]
    %v142 = vld [vmem:[#allocation7 + $0x30] sm:$0xf]
    %v143 = vld [vmem:[#allocation7 + $0x34] sm:$0xf]
    %v144 = vld [vmem:[#allocation7 + $0x38] sm:$0xf]
    %v145 = vld [vmem:[#allocation7 + $0x3c] sm:$0xf]
    %v146 = vld [vmem:[%s4] sm:$0x1]
    %v148 = vperm.slane %v146, 0
    %v166 = vunpack.c.l.b16 %v130
    %v167 = vunpack.c.l.b16 %v131
    %v168 = vunpack.c.l.b16 %v132
    %v169 = vunpack.c.l.b16 %v133
    %v170 = vunpack.c.l.b16 %v134
    %v171 = vunpack.c.l.b16 %v135
    %v172 = vunpack.c.l.b16 %v136
    %v173 = vunpack.c.l.b16 %v137
    %v174 = vunpack.c.l.b16 %v138
    %v175 = vunpack.c.l.b16 %v139
    %v176 = vunpack.c.l.b16 %v140
    %v177 = vunpack.c.l.b16 %v141
    %v178 = vunpack.c.l.b16 %v142
    %v179 = vunpack.c.l.b16 %v143
    %v180 = vunpack.c.l.b16 %v144
    %v181 = vunpack.c.l.b16 %v145
    %v182 = vpack.c.b16 %v167, %v166
    %v183 = vpack.c.b16 %v169, %v168
    %v184 = vpack.c.b16 %v171, %v170
    %v185 = vpack.c.b16 %v173, %v172
    %v186 = vpack.c.b16 %v175, %v174
    %v187 = vpack.c.b16 %v177, %v176
    %v188 = vpack.c.b16 %v179, %v178
    %v189 = vpack.c.b16 %v181, %v180
    %198 = vmatpush.bf16.msra.mxu0 %v189
    %199 = vmatpush.bf16.msra.mxu0 %v188
    %200 = vmatpush.bf16.msra.mxu0 %v187
    %201 = vmatpush.bf16.msra.mxu0 %v186
    %202 = vmatpush.bf16.msra.mxu0 %v185
    %203 = vmatpush.bf16.msra.mxu0 %v184
    %204 = vmatpush.bf16.msra.mxu0 %v183
    %205 = vmatpush.bf16.msra.mxu0 %v182
    %206 = vmatmul.bf16.gmra.mxu0 %v129
    %v207 = vpop.f32.mrf.mxu0
    %v208 = vadd.f32 %v148, %v207
    %v209 = vpop.f32.mrf.mxu0
    %210 = vdwg.mxu0
    %v211 = vmax.f32 %v208, 0.0
    %v212 = vpack.c.bf16 %v211, %v211
    %s213 = scalar_lea.vmem [#allocation7], 64
    %v214 = vld [vmem:[%s213] sm:$0xf]
    %v215 = vld [vmem:[%s213 + $0x4] sm:$0xf]
    %v216 = vld [vmem:[%s213 + $0x8] sm:$0xf]
    %v217 = vld [vmem:[%s213 + $0xc] sm:$0xf]
    %v218 = vld [vmem:[%s213 + $0x10] sm:$0xf]
    %v219 = vld [vmem:[%s213 + $0x14] sm:$0xf]
    %v220 = vld [vmem:[%s213 + $0x18] sm:$0xf]
    %v221 = vld [vmem:[%s213 + $0x1c] sm:$0xf]
    %v222 = vld [vmem:[%s213 + $0x20] sm:$0xf]
    %v223 = vld [vmem:[%s213 + $0x24] sm:$0xf]
    %v224 = vld [vmem:[%s213 + $0x28] sm:$0xf]
    %v225 = vld [vmem:[%s213 + $0x2c] sm:$0xf]
    %v226 = vld [vmem:[%s213 + $0x30] sm:$0xf]
    %v227 = vld [vmem:[%s213 + $0x34] sm:$0xf]
    %v228 = vld [vmem:[%s213 + $0x38] sm:$0xf]
    %v229 = vld [vmem:[%s213 + $0x3c] sm:$0xf]
    %s230 = scalar_lea.vmem %s4, 1
    %v231 = vld [vmem:[%s230] sm:$0x1]
    %v233 = vperm.slane %v231, 0
    %v251 = vunpack.c.l.b16 %v214
    %v252 = vunpack.c.l.b16 %v215
    %v253 = vunpack.c.l.b16 %v216
    %v254 = vunpack.c.l.b16 %v217
    %v255 = vunpack.c.l.b16 %v218
    %v256 = vunpack.c.l.b16 %v219
    %v257 = vunpack.c.l.b16 %v220
    %v258 = vunpack.c.l.b16 %v221
    %v259 = vunpack.c.l.b16 %v222
    %v260 = vunpack.c.l.b16 %v223
    %v261 = vunpack.c.l.b16 %v224
    %v262 = vunpack.c.l.b16 %v225
    %v263 = vunpack.c.l.b16 %v226
    %v264 = vunpack.c.l.b16 %v227
    %v265 = vunpack.c.l.b16 %v228
    %v266 = vunpack.c.l.b16 %v229
    %v267 = vpack.c.b16 %v252, %v251
    %v268 = vpack.c.b16 %v254, %v253
    %v269 = vpack.c.b16 %v256, %v255
    %v270 = vpack.c.b16 %v258, %v257
    %v271 = vpack.c.b16 %v260, %v259
    %v272 = vpack.c.b16 %v262, %v261
    %v273 = vpack.c.b16 %v264, %v263
    %v274 = vpack.c.b16 %v266, %v265
    %283 = vmatpush.bf16.msra.mxu0 %v274
    %284 = vmatpush.bf16.msra.mxu0 %v273
    %285 = vmatpush.bf16.msra.mxu0 %v272
    %286 = vmatpush.bf16.msra.mxu0 %v271
    %287 = vmatpush.bf16.msra.mxu0 %v270
    %288 = vmatpush.bf16.msra.mxu0 %v269
    %289 = vmatpush.bf16.msra.mxu0 %v268
    %290 = vmatpush.bf16.msra.mxu0 %v267
    %291 = vmatmul.bf16.gmra.mxu0 %v212
    %v292 = vpop.f32.mrf.mxu0
    %v293 = vadd.f32 %v233, %v292
    %v294 = vpop.f32.mrf.mxu0
    %295 = vdwg.mxu0
    %v296 = vmax.f32 %v293, 0.0
    %v297 = vpack.c.bf16 %v296, %v296
    %v298 = vld [vmem:[#allocation8] sm:$0xf]
    %v299 = vld [vmem:[#allocation8 + $0x4] sm:$0xf]
    %v300 = vld [vmem:[#allocation8 + $0x8] sm:$0xf]
    %v301 = vld [vmem:[#allocation8 + $0xc] sm:$0xf]
    %v302 = vld [vmem:[#allocation8 + $0x10] sm:$0xf]
    %v303 = vld [vmem:[#allocation8 + $0x14] sm:$0xf]
    %v304 = vld [vmem:[#allocation8 + $0x18] sm:$0xf]
    %v305 = vld [vmem:[#allocation8 + $0x1c] sm:$0xf]
    %v306 = vld [vmem:[#allocation8 + $0x20] sm:$0xf]
    %v307 = vld [vmem:[#allocation8 + $0x24] sm:$0xf]
    %v308 = vld [vmem:[#allocation8 + $0x28] sm:$0xf]
    %v309 = vld [vmem:[#allocation8 + $0x2c] sm:$0xf]
    %v310 = vld [vmem:[#allocation8 + $0x30] sm:$0xf]
    %v311 = vld [vmem:[#allocation8 + $0x34] sm:$0xf]
    %v312 = vld [vmem:[#allocation8 + $0x38] sm:$0xf]
    %v313 = vld [vmem:[#allocation8 + $0x3c] sm:$0xf]
    %v314 = vld [vmem:[%s6] sm:$0x1]
    %v316 = vperm.slane %v314, 0
    %v334 = vunpack.c.l.b16 %v298
    %v335 = vunpack.c.l.b16 %v299
    %v336 = vunpack.c.l.b16 %v300
    %v337 = vunpack.c.l.b16 %v301
    %v338 = vunpack.c.l.b16 %v302
    %v339 = vunpack.c.l.b16 %v303
    %v340 = vunpack.c.l.b16 %v304
    %v341 = vunpack.c.l.b16 %v305
    %v342 = vunpack.c.l.b16 %v306
    %v343 = vunpack.c.l.b16 %v307
    %v344 = vunpack.c.l.b16 %v308
    %v345 = vunpack.c.l.b16 %v309
    %v346 = vunpack.c.l.b16 %v310
    %v347 = vunpack.c.l.b16 %v311
    %v348 = vunpack.c.l.b16 %v312
    %v349 = vunpack.c.l.b16 %v313
    %v350 = vpack.c.b16 %v335, %v334
    %v351 = vpack.c.b16 %v337, %v336
    %v352 = vpack.c.b16 %v339, %v338
    %v353 = vpack.c.b16 %v341, %v340
    %v354 = vpack.c.b16 %v343, %v342
    %v355 = vpack.c.b16 %v345, %v344
    %v356 = vpack.c.b16 %v347, %v346
    %v357 = vpack.c.b16 %v349, %v348
    %366 = vmatpush.bf16.msra.mxu0 %v357
    %367 = vmatpush.bf16.msra.mxu0 %v356
    %368 = vmatpush.bf16.msra.mxu0 %v355
    %369 = vmatpush.bf16.msra.mxu0 %v354
    %370 = vmatpush.bf16.msra.mxu0 %v353
    %371 = vmatpush.bf16.msra.mxu0 %v352
    %372 = vmatpush.bf16.msra.mxu0 %v351
    %373 = vmatpush.bf16.msra.mxu0 %v350
    %374 = vmatmul.bf16.gmra.mxu0 %v297
    %v375 = vpop.f32.mrf.mxu0
    %v376 = vadd.f32 %v316, %v375
    %v377 = vpop.f32.mrf.mxu0
    %378 = vdwg.mxu0
    %379 = vst [vmem:[#allocation10] sm:$0xff] %v376
    %380 = vmax.xlane.f32.xlu0 %v376
    %v381 = vpop.xlane.xlu0 %380
    %v382 = vsub.f32 %v376, %v381
    %v383 = vmul.f32 %v382, 1.442695
    %v384 = vpow.pop %v383
    %385 = vadd.xlane.f32.xlu0 %v384
    %v386 = vpop.xlane.xlu0 %385
    %v387 = vrcp.pop %v386
    %v388 = vmul.f32 %v386, %v387
    %v389 = vsub.f32 1.0, %v388
    %v390 = vmul.f32 %v387, %v389
    %v391 = vadd.f32 %v387, %v390
    %vm392 = vweird.f32 %v386
    %vm393 = vweird.f32 %v387
    %vm394 = vmor %vm392, %vm393
    %v395 = vsel %vm394, %v387, %v391
    %v396 = vand.u32 2147483647, %v386
    %vm397 = vcmp.eq.f32.partialorder %v396, 8.507059e+37
    %v398 = vand.u32 %v386, 2147483648
    %v399 = vor.u32 1.1754944e-38, %v398
    %v400 = vsel %vm397, %v399, %v395
    %v401 = vmul.f32 %v384, %v400
    %s402 = scalar_lea.vmem [#allocation10], 8
    %403 = vst [vmem:[%s402] sm:$0xff] %v401
    // Predicated region
    $region46: #{tpu_custom_call.1} parent=1 // pred_check
      _
    $region47: #{tpu_custom_call.1} parent=1 // pred_check_branch
      %405 = sbr.rel (0) target = $region49
    $region48: #{tpu_custom_call.1} parent=1 // pred_region
      %407 = vsyncadd [#allocation4], 0
      %s408 = sshll.u32 [#allocation10], 4
      %s409 = int_to_ptr.vmem [resolvable:$true] %s408
      %s410 = sshll.u32 %s7, 4
      %s411 = int_to_ptr.hbm [resolvable:$true] %s410
      %416 = dma.vmem_to_hbm [thread:$0]  %s409, 256, %s411, [#allocation4], 128, 128, 8
    $region49: #{tpu_custom_call.1} parent=1 // pred_fallthru
      _
    // Predicated region
    $region50: #{tpu_custom_call.1} parent=1 // pred_check
      _
    $region51: #{tpu_custom_call.1} parent=1 // pred_check_branch
      %418 = sbr.rel (0) target = $region53
    $region52: #{tpu_custom_call.1} parent=1 // pred_region
      %420 = dma.done [#allocation4], 256
    $region53: #{tpu_custom_call.1} parent=1 // pred_fallthru
      _
    %421 = vsyncpa [#allocation3], 1
    %422 = vsyncpa [#allocation6], 1
    %423 = vsyncpa [#allocation9], 1
    %424 = vsyncpa [#allocation4], 1

// kernel: tpu_custom_call.1
$region0: #{tpu_custom_call.1}
  #allocation0 [shape = 'u32[]', space=smem, size = 0x4, offset = 0x4, fixed_abs, tag = 'smem constant byte address 0x4 - core index']
  #allocation1 [shape = 'u32[72,128]{1,0:T(1,128)}', space=vmem, size = 0x9000, scoped, tag = 'internal scratch']
  %s0 = inlined_call_operand.hbm [shape: f32[8,32], index: 0, kind: input, shape index: {}]
  %s1 = inlined_call_operand.hbm [shape: bf16[32,128], index: 1, kind: input, shape index: {}]
  %s2 = inlined_call_operand.vmem [shape: f32[1,128], index: 2, kind: input, shape index: {}]
  %s3 = inlined_call_operand.hbm [shape: bf16[2,128,128], index: 3, kind: input, shape index: {}]
  %s4 = inlined_call_operand.vmem [shape: f32[2,1,128], index: 4, kind: input, shape index: {}]
  %s5 = inlined_call_operand.hbm [shape: bf16[128,128], index: 5, kind: input, shape index: {}]
  %s6 = inlined_call_operand.vmem [shape: f32[1,128], index: 6, kind: input, shape index: {}]
  %s7 = inlined_call_operand.hbm [shape: f32[2,8,128], index: 7, kind: output, shape index: {}]
  %s8 = sld [smem:[#allocation0]]
  $region54: #{tpu_custom_call.1} parent=0
    _
  %s10 = ssub.s32 1, %s8
  %s11 = scalar_select 0, %s10, %s8
  $region1: #{tpu_custom_call.1} parent=0
    #allocation2 [shape = 'u8[4096]{0}', space=vmem, size = 0x1000, scoped, tag = 'input window, operand 0, single buffered']
    #allocation3 [shape = 's32[1]{0}', space=sflag, size = 0x4, scoped, tag = 'scoped memory for tpu_custom_call.1']
    #allocation4 [shape = 's32[1]{0}', space=sflag, size = 0x4, scoped, tag = 'scoped memory for tpu_custom_call.1']
    #allocation5 [shape = 'u8[8192]{0}', space=vmem, size = 0x2000, scoped, tag = 'input window, operand 1, single buffered']
    #allocation6 [shape = 's32[1]{0}', space=sflag, size = 0x4, scoped, tag = 'scoped memory for tpu_custom_call.1']
    #allocation7 [shape = 'u8[65536]{0}', space=vmem, size = 0x10000, scoped, tag = 'input window, operand 3, single buffered']
    #allocation8 [shape = 'u8[32768]{0}', space=vmem, size = 0x8000, scoped, tag = 'input window, operand 5, single buffered']
    #allocation9 [shape = 's32[1]{0}', space=sflag, size = 0x4, scoped, tag = 'scoped memory for tpu_custom_call.1']
    #allocation10 [shape = 'u8[8192]{0}', space=vmem, size = 0x2000, scoped, tag = 'output window, operand 0, single buffered']
    %12 = vsyncpa [#allocation3], 0
    %13 = vsyncpa [#allocation6], 0
    %14 = vsyncpa [#allocation9], 0
    %15 = vsyncpa [#allocation4], 0
    // Predicated region
    $region2: #{tpu_custom_call.1} parent=1 // pred_check
      _
    $region3: #{tpu_custom_call.1} parent=1 // pred_check_branch
      %17 = sbr.rel (0) target = $region5
    $region4: #{tpu_custom_call.1} parent=1 // pred_region
      %19 = vsyncadd [#allocation3], 0
      %s21 = sshll.u32 %s0, 4
      %s22 = int_to_ptr.hbm [resolvable:$true] %s21
      %s23 = sshll.u32 [#allocation2], 4
      %s24 = int_to_ptr.vmem [resolvable:$true] %s23
      %26 = dma.hbm_to_vmem [thread:$0]  %s22, 128, %s24, [#allocation3]
    $region5: #{tpu_custom_call.1} parent=1 // pred_fallthru
      _
    // Predicated region
    $region6: #{tpu_custom_call.1} parent=1 // pred_check
      _
    $region7: #{tpu_custom_call.1} parent=1 // pred_check_branch
      %28 = sbr.rel (0) target = $region9
    $region8: #{tpu_custom_call.1} parent=1 // pred_region
      %30 = vsyncadd [#allocation6], 0
      %s31 = sshll.u32 %s1, 4
      %s32 = int_to_ptr.hbm [resolvable:$true] %s31
      %s33 = sshll.u32 [#allocation5], 4
      %s34 = int_to_ptr.vmem [resolvable:$true] %s33
      %39 = dma.hbm_to_vmem [thread:$0]  %s32, 256, %s34, [#allocation6], 64, 64, 4
    $region9: #{tpu_custom_call.1} parent=1 // pred_fallthru
      _
    // Predicated region
    $region10: #{tpu_custom_call.1} parent=1 // pred_check
      _
    $region11: #{tpu_custom_call.1} parent=1 // pred_check_branch
      %41 = sbr.rel (0) target = $region13
    $region12: #{tpu_custom_call.1} parent=1 // pred_region
      _
    $region13: #{tpu_custom_call.1} parent=1 // pred_fallthru
      _
    // Predicated region
    $region14: #{tpu_custom_call.1} parent=1 // pred_check
      _
    $region15: #{tpu_custom_call.1} parent=1 // pred_check_branch
      %43 = sbr.rel (0) target = $region17
    $region16: #{tpu_custom_call.1} parent=1 // pred_region
      %45 = vsyncadd [#allocation6], 0
      %s46 = sshll.u32 %s3, 4
      %s47 = int_to_ptr.hbm [resolvable:$true] %s46
      %s48 = sshll.u32 [#allocation7], 4
      %s49 = int_to_ptr.vmem [resolvable:$true] %s48
      %54 = dma.hbm_to_vmem [thread:$0]  %s47, 2048, %s49, [#allocation6], 64, 64, 4
    $region17: #{tpu_custom_call.1} parent=1 // pred_fallthru
      _
    // Predicated region
    $region18: #{tpu_custom_call.1} parent=1 // pred_check
      _
    $region19: #{tpu_custom_call.1} parent=1 // pred_check_branch
      %56 = sbr.rel (0) target = $region21
    $region20: #{tpu_custom_call.1} parent=1 // pred_region
      _
    $region21: #{tpu_custom_call.1} parent=1 // pred_fallthru
      _
    // Predicated region
    $region22: #{tpu_custom_call.1} parent=1 // pred_check
      _
    $region23: #{tpu_custom_call.1} parent=1 // pred_check_branch
      %58 = sbr.rel (0) target = $region25
    $region24: #{tpu_custom_call.1} parent=1 // pred_region
      %60 = vsyncadd [#allocation9], 0
      %s61 = sshll.u32 %s5, 4
      %s62 = int_to_ptr.hbm [resolvable:$true] %s61
      %s63 = sshll.u32 [#allocation8], 4
      %s64 = int_to_ptr.vmem [resolvable:$true] %s63
      %69 = dma.hbm_to_vmem [thread:$0]  %s62, 1024, %s64, [#allocation9], 64, 64, 4
    $region25: #{tpu_custom_call.1} parent=1 // pred_fallthru
      _
    // Predicated region
    $region26: #{tpu_custom_call.1} parent=1 // pred_check
      _
    $region27: #{tpu_custom_call.1} parent=1 // pred_check_branch
      %71 = sbr.rel (0) target = $region29
    $region28: #{tpu_custom_call.1} parent=1 // pred_region
      _
    $region29: #{tpu_custom_call.1} parent=1 // pred_fallthru
      _
    // Predicated region
    $region30: #{tpu_custom_call.1} parent=1 // pred_check
      _
    $region31: #{tpu_custom_call.1} parent=1 // pred_check_branch
      %73 = sbr.rel (0) target = $region33
    $region32: #{tpu_custom_call.1} parent=1 // pred_region
      %75 = dma.done [#allocation3], 128
    $region33: #{tpu_custom_call.1} parent=1 // pred_fallthru
      _
    // Predicated region
    $region34: #{tpu_custom_call.1} parent=1 // pred_check
      _
    $region35: #{tpu_custom_call.1} parent=1 // pred_check_branch
      %77 = sbr.rel (0) target = $region37
    $region36: #{tpu_custom_call.1} parent=1 // pred_region
      %79 = dma.done [#allocation6], 256
    $region37: #{tpu_custom_call.1} parent=1 // pred_fallthru
      _
    // Predicated region
    $region38: #{tpu_custom_call.1} parent=1 // pred_check
      _
    $region39: #{tpu_custom_call.1} parent=1 // pred_check_branch
      %81 = sbr.rel (0) target = $region41
    $region40: #{tpu_custom_call.1} parent=1 // pred_region
      %83 = dma.done [#allocation6], 2048
    $region41: #{tpu_custom_call.1} parent=1 // pred_fallthru
      _
    // Predicated region
    $region42: #{tpu_custom_call.1} parent=1 // pred_check
      _
    $region43: #{tpu_custom_call.1} parent=1 // pred_check_branch
      %85 = sbr.rel (0) target = $region45
    $region44: #{tpu_custom_call.1} parent=1 // pred_region
      %87 = dma.done [#allocation9], 1024
    $region45: #{tpu_custom_call.1} parent=1 // pred_fallthru
      _
    %v89 = vld [vmem:[#allocation2] sm:$0xff]
    %v90 = vpack.c.bf16 %v89, %v89
    %v91 = vld [vmem:[#allocation5] sm:$0xf]
    %v92 = vld [vmem:[#allocation5 + $0x4] sm:$0xf]
    %v93 = vld [vmem:[#allocation5 + $0x8] sm:$0xf]
    %v94 = vld [vmem:[#allocation5 + $0xc] sm:$0xf]
    %v95 = vld [vmem:[%s2] sm:$0x1]
    %v97 = vperm.slane %v95, 0
    %v103 = vunpack.c.l.b16 %v91
    %v104 = vunpack.c.l.b16 %v92
    %v105 = vunpack.c.l.b16 %v93
    %v106 = vunpack.c.l.b16 %v94
    %v107 = vpack.c.b16 %v104, %v103
    %v108 = vpack.c.b16 %v106, %v105
    %vm111 = vcmask 261120
    %v113 = vsel %vm111, %v90, 0
    %115 = vmatpush.bf16.msra.mxu0 0
    %116 = vmatpush.bf16.msra.mxu0 0
    %117 = vmatpush.bf16.msra.mxu0 0
    %118 = vmatpush.bf16.msra.mxu0 0
    %119 = vmatpush.bf16.msra.mxu0 0
    %120 = vmatpush.bf16.msra.mxu0 0
    %121 = vmatpush.bf16.msra.mxu0 %v108
    %122 = vmatpush.bf16.msra.mxu0 %v107
    %123 = vmatmul.bf16.gmra.mxu0 %v113
    %v124 = vpop.f32.mrf.mxu0
    %v125 = vadd.f32 %v97, %v124
    %v126 = vpop.f32.mrf.mxu0
    %127 = vdwg.mxu0
    %v128 = vmax.f32 %v125, 0.0
    %v129 = vpack.c.bf16 %v128, %v128
    %v130 = vld [vmem:[#allocation7] sm:$0xf]
    %v131 = vld [vmem:[#allocation7 + $0x4] sm:$0xf]
    %v132 = vld [vmem:[#allocation7 + $0x8] sm:$0xf]
    %v133 = vld [vmem:[#allocation7 + $0xc] sm:$0xf]
    %v134 = vld [vmem:[#allocation7 + $0x10] sm:$0xf]
    %v135 = vld [vmem:[#allocation7 + $0x14] sm:$0xf]
    %v136 = vld [vmem:[#allocation7 + $0x18] sm:$0xf]
    %v137 = vld [vmem:[#allocation7 + $0x1c] sm:$0xf]
    %v138 = vld [vmem:[#allocation7 + $0x20] sm:$0xf]
    %v139 = vld [vmem:[#allocation7 + $0x24] sm:$0xf]
    %v140 = vld [vmem:[#allocation7 + $0x28] sm:$0xf]
    %v141 = vld [vmem:[#allocation7 + $0x2c] sm:$0xf]
    %v142 = vld [vmem:[#allocation7 + $0x30] sm:$0xf]
    %v143 = vld [vmem:[#allocation7 + $0x34] sm:$0xf]
    %v144 = vld [vmem:[#allocation7 + $0x38] sm:$0xf]
    %v145 = vld [vmem:[#allocation7 + $0x3c] sm:$0xf]
    %v146 = vld [vmem:[%s4] sm:$0x1]
    %v148 = vperm.slane %v146, 0
    %v166 = vunpack.c.l.b16 %v130
    %v167 = vunpack.c.l.b16 %v131
    %v168 = vunpack.c.l.b16 %v132
    %v169 = vunpack.c.l.b16 %v133
    %v170 = vunpack.c.l.b16 %v134
    %v171 = vunpack.c.l.b16 %v135
    %v172 = vunpack.c.l.b16 %v136
    %v173 = vunpack.c.l.b16 %v137
    %v174 = vunpack.c.l.b16 %v138
    %v175 = vunpack.c.l.b16 %v139
    %v176 = vunpack.c.l.b16 %v140
    %v177 = vunpack.c.l.b16 %v141
    %v178 = vunpack.c.l.b16 %v142
    %v179 = vunpack.c.l.b16 %v143
    %v180 = vunpack.c.l.b16 %v144
    %v181 = vunpack.c.l.b16 %v145
    %v182 = vpack.c.b16 %v167, %v166
    %v183 = vpack.c.b16 %v169, %v168
    %v184 = vpack.c.b16 %v171, %v170
    %v185 = vpack.c.b16 %v173, %v172
    %v186 = vpack.c.b16 %v175, %v174
    %v187 = vpack.c.b16 %v177, %v176
    %v188 = vpack.c.b16 %v179, %v178
    %v189 = vpack.c.b16 %v181, %v180
    %198 = vmatpush.bf16.msra.mxu0 %v189
    %199 = vmatpush.bf16.msra.mxu0 %v188
    %200 = vmatpush.bf16.msra.mxu0 %v187
    %201 = vmatpush.bf16.msra.mxu0 %v186
    %202 = vmatpush.bf16.msra.mxu0 %v185
    %203 = vmatpush.bf16.msra.mxu0 %v184
    %204 = vmatpush.bf16.msra.mxu0 %v183
    %205 = vmatpush.bf16.msra.mxu0 %v182
    %206 = vmatmul.bf16.gmra.mxu0 %v129
    %v207 = vpop.f32.mrf.mxu0
    %v208 = vadd.f32 %v148, %v207
    %v209 = vpop.f32.mrf.mxu0
    %210 = vdwg.mxu0
    %v211 = vmax.f32 %v208, 0.0
    %v212 = vpack.c.bf16 %v211, %v211
    %s213 = scalar_lea.vmem [#allocation7], 64
    %v214 = vld [vmem:[%s213] sm:$0xf]
    %v215 = vld [vmem:[%s213 + $0x4] sm:$0xf]
    %v216 = vld [vmem:[%s213 + $0x8] sm:$0xf]
    %v217 = vld [vmem:[%s213 + $0xc] sm:$0xf]
    %v218 = vld [vmem:[%s213 + $0x10] sm:$0xf]
    %v219 = vld [vmem:[%s213 + $0x14] sm:$0xf]
    %v220 = vld [vmem:[%s213 + $0x18] sm:$0xf]
    %v221 = vld [vmem:[%s213 + $0x1c] sm:$0xf]
    %v222 = vld [vmem:[%s213 + $0x20] sm:$0xf]
    %v223 = vld [vmem:[%s213 + $0x24] sm:$0xf]
    %v224 = vld [vmem:[%s213 + $0x28] sm:$0xf]
    %v225 = vld [vmem:[%s213 + $0x2c] sm:$0xf]
    %v226 = vld [vmem:[%s213 + $0x30] sm:$0xf]
    %v227 = vld [vmem:[%s213 + $0x34] sm:$0xf]
    %v228 = vld [vmem:[%s213 + $0x38] sm:$0xf]
    %v229 = vld [vmem:[%s213 + $0x3c] sm:$0xf]
    %s230 = scalar_lea.vmem %s4, 1
    %v231 = vld [vmem:[%s230] sm:$0x1]
    %v233 = vperm.slane %v231, 0
    %v251 = vunpack.c.l.b16 %v214
    %v252 = vunpack.c.l.b16 %v215
    %v253 = vunpack.c.l.b16 %v216
    %v254 = vunpack.c.l.b16 %v217
    %v255 = vunpack.c.l.b16 %v218
    %v256 = vunpack.c.l.b16 %v219
    %v257 = vunpack.c.l.b16 %v220
    %v258 = vunpack.c.l.b16 %v221
    %v259 = vunpack.c.l.b16 %v222
    %v260 = vunpack.c.l.b16 %v223
    %v261 = vunpack.c.l.b16 %v224
    %v262 = vunpack.c.l.b16 %v225
    %v263 = vunpack.c.l.b16 %v226
    %v264 = vunpack.c.l.b16 %v227
    %v265 = vunpack.c.l.b16 %v228
    %v266 = vunpack.c.l.b16 %v229
    %v267 = vpack.c.b16 %v252, %v251
    %v268 = vpack.c.b16 %v254, %v253
    %v269 = vpack.c.b16 %v256, %v255
    %v270 = vpack.c.b16 %v258, %v257
    %v271 = vpack.c.b16 %v260, %v259
    %v272 = vpack.c.b16 %v262, %v261
    %v273 = vpack.c.b16 %v264, %v263
    %v274 = vpack.c.b16 %v266, %v265
    %283 = vmatpush.bf16.msra.mxu0 %v274
    %284 = vmatpush.bf16.msra.mxu0 %v273
    %285 = vmatpush.bf16.msra.mxu0 %v272
    %286 = vmatpush.bf16.msra.mxu0 %v271
    %287 = vmatpush.bf16.msra.mxu0 %v270
    %288 = vmatpush.bf16.msra.mxu0 %v269
    %289 = vmatpush.bf16.msra.mxu0 %v268
    %290 = vmatpush.bf16.msra.mxu0 %v267
    %291 = vmatmul.bf16.gmra.mxu0 %v212
    %v292 = vpop.f32.mrf.mxu0
    %v293 = vadd.f32 %v233, %v292
    %v294 = vpop.f32.mrf.mxu0
    %295 = vdwg.mxu0
    %v296 = vmax.f32 %v293, 0.0
    %v297 = vpack.c.bf16 %v296, %v296
    %v298 = vld [vmem:[#allocation8] sm:$0xf]
    %v299 = vld [vmem:[#allocation8 + $0x4] sm:$0xf]
    %v300 = vld [vmem:[#allocation8 + $0x8] sm:$0xf]
    %v301 = vld [vmem:[#allocation8 + $0xc] sm:$0xf]
    %v302 = vld [vmem:[#allocation8 + $0x10] sm:$0xf]
    %v303 = vld [vmem:[#allocation8 + $0x14] sm:$0xf]
    %v304 = vld [vmem:[#allocation8 + $0x18] sm:$0xf]
    %v305 = vld [vmem:[#allocation8 + $0x1c] sm:$0xf]
    %v306 = vld [vmem:[#allocation8 + $0x20] sm:$0xf]
    %v307 = vld [vmem:[#allocation8 + $0x24] sm:$0xf]
    %v308 = vld [vmem:[#allocation8 + $0x28] sm:$0xf]
    %v309 = vld [vmem:[#allocation8 + $0x2c] sm:$0xf]
    %v310 = vld [vmem:[#allocation8 + $0x30] sm:$0xf]
    %v311 = vld [vmem:[#allocation8 + $0x34] sm:$0xf]
    %v312 = vld [vmem:[#allocation8 + $0x38] sm:$0xf]
    %v313 = vld [vmem:[#allocation8 + $0x3c] sm:$0xf]
    %v314 = vld [vmem:[%s6] sm:$0x1]
    %v316 = vperm.slane %v314, 0
    %v334 = vunpack.c.l.b16 %v298
    %v335 = vunpack.c.l.b16 %v299
    %v336 = vunpack.c.l.b16 %v300
    %v337 = vunpack.c.l.b16 %v301
    %v338 = vunpack.c.l.b16 %v302
    %v339 = vunpack.c.l.b16 %v303
    %v340 = vunpack.c.l.b16 %v304
    %v341 = vunpack.c.l.b16 %v305
    %v342 = vunpack.c.l.b16 %v306
    %v343 = vunpack.c.l.b16 %v307
    %v344 = vunpack.c.l.b16 %v308
    %v345 = vunpack.c.l.b16 %v309
    %v346 = vunpack.c.l.b16 %v310
    %v347 = vunpack.c.l.b16 %v311
    %v348 = vunpack.c.l.b16 %v312
    %v349 = vunpack.c.l.b16 %v313
    %v350 = vpack.c.b16 %v335, %v334
    %v351 = vpack.c.b16 %v337, %v336
    %v352 = vpack.c.b16 %v339, %v338
    %v353 = vpack.c.b16 %v341, %v340
    %v354 = vpack.c.b16 %v343, %v342
    %v355 = vpack.c.b16 %v345, %v344
    %v356 = vpack.c.b16 %v347, %v346
    %v357 = vpack.c.b16 %v349, %v348
    %366 = vmatpush.bf16.msra.mxu0 %v357
    %367 = vmatpush.bf16.msra.mxu0 %v356
    %368 = vmatpush.bf16.msra.mxu0 %v355
    %369 = vmatpush.bf16.msra.mxu0 %v354
    %370 = vmatpush.bf16.msra.mxu0 %v353
    %371 = vmatpush.bf16.msra.mxu0 %v352
    %372 = vmatpush.bf16.msra.mxu0 %v351
    %373 = vmatpush.bf16.msra.mxu0 %v350
    %374 = vmatmul.bf16.gmra.mxu0 %v297
    %v375 = vpop.f32.mrf.mxu0
    %v376 = vadd.f32 %v316, %v375
    %v377 = vpop.f32.mrf.mxu0
    %378 = vdwg.mxu0
    %379 = vst [vmem:[#allocation10] sm:$0xff] %v376
    %380 = vmax.xlane.f32.xlu0 %v376
    %v381 = vpop.xlane.xlu0 %380
    %v382 = vsub.f32 %v376, %v381
    %v383 = vmul.f32 %v382, 1.442695
    %v384 = vpow.pop %v383
    %385 = vadd.xlane.f32.xlu0 %v384
    %v386 = vpop.xlane.xlu0 %385
    %v387 = vrcp.pop %v386
    %v388 = vmul.f32 %v386, %v387
    %v389 = vsub.f32 1.0, %v388
    %v390 = vmul.f32 %v387, %v389
    %v391 = vadd.f32 %v387, %v390
    %vm392 = vweird.f32 %v386
    %vm393 = vweird.f32 %v387
    %vm394 = vmor %vm392, %vm393
    %v395 = vsel %vm394, %v387, %v391
    %v396 = vand.u32 2147483647, %v386
    %vm397 = vcmp.eq.f32.partialorder %v396, 8.507059e+37
    %v398 = vand.u32 %v386, 2147483648
    %v399 = vor.u32 1.1754944e-38, %v398
    %v400 = vsel %vm397, %v399, %v395
    %v401 = vmul.f32 %v384, %v400
    %s402 = scalar_lea.vmem [#allocation10], 8
    %403 = vst [vmem:[%s402] sm:$0xff] %v401
    // Predicated region
    $region46: #{tpu_custom_call.1} parent=1 // pred_check
      _
    $region47: #{tpu_custom_call.1} parent=1 // pred_check_branch
      %405 = sbr.rel (0) target = $region49
    $region48: #{tpu_custom_call.1} parent=1 // pred_region
      %407 = vsyncadd [#allocation4], 0
      %s408 = sshll.u32 [#allocation10], 4
      %s409 = int_to_ptr.vmem [resolvable:$true] %s408
      %s410 = sshll.u32 %s7, 4
      %s411 = int_to_ptr.hbm [resolvable:$true] %s410
      %416 = dma.vmem_to_hbm [thread:$0]  %s409, 256, %s411, [#allocation4], 128, 128, 8
    $region49: #{tpu_custom_call.1} parent=1 // pred_fallthru
      _
    // Predicated region
    $region50: #{tpu_custom_call.1} parent=1 // pred_check
      _
    $region51: #{tpu_custom_call.1} parent=1 // pred_check_branch
      %418 = sbr.rel (0) target = $region53
    $region52: #{tpu_custom_call.1} parent=1 // pred_region
      %420 = dma.done [#allocation4], 256
    $region53: #{tpu_custom_call.1} parent=1 // pred_fallthru
      _
    %421 = vsyncpa [#allocation3], 1
    %422 = vsyncpa [#allocation6], 1
    %423 = vsyncpa [#allocation9], 1
    %424 = vsyncpa [#allocation4], 1

</llo_original>
